<compile_context>
chip_gen: v7x
topology: tpu7x:2x2x1
jax: 0.10.0
libtpu: 0.0.40
codegen_flags: <defaults>
</compile_context>

<pallas_src>
import jax
import jax.numpy as jnp
import numpy as np
from jax.experimental import pallas as pl
from jax.experimental.pallas import tpu as pltpu

POS_WEIGHT = 5.0
GUIDE_SIGMA = 3.125
VMEM_LIMIT_BYTES = 32 * 1024 * 1024  # safe on v5e/v6e (128 MiB) and v7x (64 MiB)


def _rsum111(x):
    """Reduce a (1, A, B) array to (1, 1, 1): sublane reduce then lane reduce."""
    x = jnp.sum(x, axis=1, keepdims=True)
    x = jnp.sum(x, axis=2, keepdims=True)
    return x


def _largest_divisor_tile(dim, multiple, cap):
    """Largest divisor of `dim` that is a multiple of `multiple` and <= cap.
    Falls back to the full dim (always a legal block: equals the array dim)."""
    best = None
    d = multiple
    while d <= min(dim, cap):
        if dim % d == 0:
            best = d
        d += multiple
    return best if best is not None else dim


# --------------------- kernel 1: masked L1 (mel) + BCE (gate) ---------------------

def _mel_gate_kernel(mel_len_ref,                                   # SMEM (B,) int32
                     mel_out_ref, mel_post_ref, mel_tgt_ref,        # VMEM (1, M, Tt)
                     gate_out_ref, gate_tgt_ref,                    # VMEM (1, 1, Tt)
                     l1_pre_ref, l1_post_ref, bce_ref):             # VMEM (1, 1, 1) accs
    b = pl.program_id(0)
    tb = pl.program_id(1)
    t_tile = mel_out_ref.shape[2]

    @pl.when(tb == 0)
    def _init():
        l1_pre_ref[...] = jnp.zeros_like(l1_pre_ref)
        l1_post_ref[...] = jnp.zeros_like(l1_post_ref)
        bce_ref[...] = jnp.zeros_like(bce_ref)

    t_len = mel_len_ref[b]                                         # scalar (SMEM)
    t_idx = jax.lax.broadcasted_iota(jnp.int32, (1, 1, t_tile), 2) + tb * t_tile
    valid = t_idx < t_len                                          # (1, 1, Tt) bool

    mel_out = mel_out_ref[...].astype(jnp.float32)                 # (1, M, Tt)
    mel_post = mel_post_ref[...].astype(jnp.float32)
    mel_tgt = mel_tgt_ref[...].astype(jnp.float32)
    l1_pre_ref[...] += _rsum111(jnp.where(valid, jnp.abs(mel_out - mel_tgt), 0.0))
    l1_post_ref[...] += _rsum111(jnp.where(valid, jnp.abs(mel_post - mel_tgt), 0.0))

    # BCE-with-logits, pos_weight = 5.0 (stable softplus via log1p).
    x = gate_out_ref[...].astype(jnp.float32)                      # (1, 1, Tt)
    y = gate_tgt_ref[...].astype(jnp.float32)
    softplus_negx = jnp.maximum(-x, 0.0) + jnp.log1p(jnp.exp(-jnp.abs(x)))
    bce = (1.0 - y) * x + (POS_WEIGHT * y + (1.0 - y)) * softplus_negx
    bce_ref[...] += _rsum111(jnp.where(valid, bce, 0.0))


# --------------------- kernel 2: guided-attention numerator -----------------------

def _guide_kernel(mel_len_ref, text_len_ref,                       # SMEM (B,) int32
                  align_ref,                                       # VMEM (1, 4, Tt, L)
                  guide_ref):                                      # VMEM (1, 1, 1) acc
    b = pl.program_id(0)
    tb = pl.program_id(1)
    _, _, t_tile, l_dim = align_ref.shape

    @pl.when(tb == 0)
    def _init():
        guide_ref[...] = jnp.zeros_like(guide_ref)

    t_len = mel_len_ref[b]
    l_len = text_len_ref[b]
    inv_t = 1.0 / t_len.astype(jnp.float32)
    inv_l = 1.0 / l_len.astype(jnp.float32)

    m_idx = jax.lax.broadcasted_iota(jnp.int32, (1, t_tile, l_dim), 1) + tb * t_tile
    n_idx = jax.lax.broadcasted_iota(jnp.int32, (1, t_tile, l_dim), 2)
    diff = m_idx.astype(jnp.float32) * inv_t - n_idx.astype(jnp.float32) * inv_l
    valid = jnp.logical_and(m_idx < t_len, n_idx < l_len)
    # Mask folded into the weight with a single select (no separate gmask multiply).
    w = jnp.where(valid, 1.0 - jnp.exp(-GUIDE_SIGMA * diff * diff), 0.0)

    # 2 layers x 2 heads share identical lengths -> identical weight; sum the
    # 4 alignment maps first (cheap VPU adds) so exp/mul work happens once, not 4x.
    a = align_ref[...].astype(jnp.float32)                         # (1, 4, Tt, L)
    a_sum = a[:, 0] + a[:, 1] + a[:, 2] + a[:, 3]                  # (1, Tt, L)
    guide_ref[...] += _rsum111(a_sum * w)


# ------------------------------------ wrapper -------------------------------------

def transformer_loss(pred, target, guide):
    mel_out, mel_out_post, gate_out = pred
    mel_target, gate_target = target
    alignments, text_lengths, mel_lengths = guide

    B, M, T = mel_out.shape
    _, n_layers, n_heads, Ta, L = alignments.shape
    # NOTE: as in the PyTorch original, max(mel_lengths) <= T and
    # max(text_lengths) <= L are assumed.

    mel_len = mel_lengths.astype(jnp.int32).reshape(B)
    text_len = text_lengths.astype(jnp.int32).reshape(B)

    # ---------------- kernel 1: mel L1 + gate BCE, tiled over (B, T) --------------
    t_tile = _largest_divisor_tile(T, 128, 1024)
    n_tb = T // t_tile
    gate_out3 = gate_out.reshape(B, 1, T)
    gate_tgt3 = gate_target.reshape(B, 1, T)

    mel_spec = pl.BlockSpec((1, M, t_tile), lambda b, t, *_: (b, 0, t))
    gate_spec = pl.BlockSpec((1, 1, t_tile), lambda b, t, *_: (b, 0, t))
    acc_spec = pl.BlockSpec((1, 1, 1), lambda b, t, *_: (b, 0, 0))

    l1_pre, l1_post, bce_sum = pl.pallas_call(
        _mel_gate_kernel,
        out_shape=tuple(jax.ShapeDtypeStruct((B, 1, 1), jnp.float32) for _ in range(3)),
        grid_spec=pltpu.PrefetchScalarGridSpec(
            num_scalar_prefetch=1,
            grid=(B, n_tb),
            in_specs=[mel_spec, mel_spec, mel_spec, gate_spec, gate_spec],
            out_specs=[acc_spec, acc_spec, acc_spec],
        ),
        compiler_params=pltpu.CompilerParams(
            dimension_semantics=("parallel", "arbitrary"),
            vmem_limit_bytes=VMEM_LIMIT_BYTES),
    )(mel_len, mel_out, mel_out_post, mel_target, gate_out3, gate_tgt3)

    # ---------------- kernel 2: guided attention, tiled over (B, Ta) --------------
    # Guide loss only uses alignments[:, -2:, :2]; slice/reshape is JAX glue.
    align4 = alignments[:, -2:, :2].reshape(B, 4, Ta, L)
    tg_tile = _largest_divisor_tile(Ta, 16, 256)
    n_tg = Ta // tg_tile

    align_spec = pl.BlockSpec((1, 4, tg_tile, L), lambda b, t, *_: (b, 0, t, 0))
    gacc_spec = pl.BlockSpec((1, 1, 1), lambda b, t, *_: (b, 0, 0))

    guide_sum = pl.pallas_call(
        _guide_kernel,
        out_shape=jax.ShapeDtypeStruct((B, 1, 1), jnp.float32),
        grid_spec=pltpu.PrefetchScalarGridSpec(
            num_scalar_prefetch=2,
            grid=(B, n_tg),
            in_specs=[align_spec],
            out_specs=gacc_spec,
        ),
        compiler_params=pltpu.CompilerParams(
            dimension_semantics=("parallel", "arbitrary"),
            vmem_limit_bytes=VMEM_LIMIT_BYTES),
    )(mel_len, text_len, align4)

    # -------- denominators: pure scalar math (no full-tensor reductions) ----------
    t_clamp = jnp.minimum(mel_len, T).astype(jnp.float32)
    l_clamp = jnp.minimum(text_len, L).astype(jnp.float32)
    cnt_gate = jnp.sum(t_clamp)
    cnt_mel = cnt_gate * jnp.float32(M)
    cnt_guide = 4.0 * jnp.sum(t_clamp * l_clamp)

    mel_loss = (jnp.sum(l1_pre) + jnp.sum(l1_post)) / cnt_mel
    bce_loss = jnp.sum(bce_sum) / cnt_gate
    guide_loss = jnp.sum(guide_sum) / cnt_guide
    return mel_loss, bce_loss, guide_loss


# --------------------------------- pure-JAX reference -----------------------------

def _reference(pred, target, guide):
    mel_out, mel_out_post, gate_out = [a.astype(jnp.float32) for a in pred]
    mel_target, gate_target = [a.astype(jnp.float32) for a in target]
    alignments, text_lengths, mel_lengths = guide
    alignments = alignments.astype(jnp.float32)
    B, M, T = mel_out.shape
    valid = (jnp.arange(T)[None, :] < mel_lengths[:, None]).astype(jnp.float32)
    m3 = valid[:, None, :]
    cnt_mel = jnp.sum(valid) * M
    mel_loss = (jnp.sum(jnp.abs(mel_out - mel_target) * m3)
                + jnp.sum(jnp.abs(mel_out_post - mel_target) * m3)) / cnt_mel
    x, y = gate_out, gate_target
    sp = jnp.maximum(-x, 0.0) + jnp.log1p(jnp.exp(-jnp.abs(x)))
    bce = (1.0 - y) * x + (POS_WEIGHT * y + (1.0 - y)) * sp
    bce_loss = jnp.sum(bce * valid) / jnp.sum(valid)
    _, _, _, Ta, L = alignments.shape
    t = mel_lengths.astype(jnp.float32)[:, None, None]
    l = text_lengths.astype(jnp.float32)[:, None, None]
    m_idx = jnp.arange(Ta, dtype=jnp.float32)[None, :, None]
    n_idx = jnp.arange(L, dtype=jnp.float32)[None, None, :]
    w = 1.0 - jnp.exp(-GUIDE_SIGMA * (m_idx / t - n_idx / l) ** 2)
    gmask = ((m_idx < t) & (n_idx < l)).astype(jnp.float32)
    applied = alignments[:, -2:, :2]
    guide_loss = jnp.sum(applied * (w * gmask)[:, None, None]) / (4.0 * jnp.sum(gmask))
    return mel_loss, bce_loss, guide_loss


if __name__ == "__main__":
    key = jax.random.PRNGKey(0)
    B, M, T, L = 2, 8, 16, 8
    n_layers, n_heads = 4, 2
    ks = jax.random.split(key, 6)

    mel_out = jax.random.normal(ks[0], (B, M, T), jnp.float32)
    mel_out_post = jax.random.normal(ks[1], (B, M, T), jnp.float32)
    mel_target = jax.random.normal(ks[2], (B, M, T), jnp.float32)
    gate_out = jax.random.normal(ks[3], (B, T), jnp.float32)
    gate_target = (jax.random.uniform(ks[4], (B, T)) > 0.8).astype(jnp.float32)
    alignments = jax.nn.softmax(
        jax.random.normal(ks[5], (B, n_layers, n_heads, T, L), jnp.float32), axis=-1)
    mel_lengths = jnp.array([16, 12], jnp.int32)    # max == T, as PyTorch requires
    text_lengths = jnp.array([8, 6], jnp.int32)

    pred = (mel_out, mel_out_post, gate_out)
    target = (mel_target, gate_target)
    guide = (alignments, text_lengths, mel_lengths)

    out = jax.block_until_ready(transformer_loss(pred, target, guide))
    ref = jax.block_until_ready(_reference(pred, target, guide))
    for got, want in zip(out, ref):
        np.testing.assert_allclose(np.asarray(got), np.asarray(want), rtol=1e-5, atol=1e-5)

    # bf16 inputs: kernel upcasts per tile, accumulates in f32 (halves HBM traffic).
    pred_bf = (mel_out.astype(jnp.bfloat16), mel_out_post.astype(jnp.bfloat16),
               gate_out.astype(jnp.bfloat16))
    target_bf = (mel_target.astype(jnp.bfloat16), gate_target.astype(jnp.bfloat16))
    guide_bf = (alignments.astype(jnp.bfloat16), text_lengths, mel_lengths)
    out_bf = jax.block_until_ready(transformer_loss(pred_bf, target_bf, guide_bf))
    ref_bf = jax.block_until_ready(_reference(pred_bf, target_bf, guide_bf))
    for got, want in zip(out_bf, ref_bf):
        np.testing.assert_allclose(np.asarray(got), np.asarray(want), rtol=1e-3, atol=1e-3)

    print("KERNEL_OK")
</pallas_src>

<mosaic_0001>
module attributes {stable_mosaic.version = 11 : i64} {
  func.func @_mel_gate_kernel(%arg0: i32, %arg1: i32, %arg2: memref<2xi32, #tpu.memory_space<smem>>, %arg3: memref<1x8x16xf32, #tpu.memory_space<vmem>>, %arg4: memref<1x8x16xf32, #tpu.memory_space<vmem>>, %arg5: memref<1x8x16xf32, #tpu.memory_space<vmem>>, %arg6: memref<1x1x16xf32, #tpu.memory_space<vmem>>, %arg7: memref<1x1x16xf32, #tpu.memory_space<vmem>>, %arg8: memref<1x1x1xf32, #tpu.memory_space<vmem>>, %arg9: memref<1x1x1xf32, #tpu.memory_space<vmem>>, %arg10: memref<1x1x1xf32, #tpu.memory_space<vmem>>) attributes {dimension_semantics = [#tpu.dimension_semantics<parallel>, #tpu.dimension_semantics<arbitrary>], iteration_bounds = array<i64: 2, 1>, scalar_prefetch = 1 : i64, scratch_operands = 0 : i64, tpu.core_type = #tpu.core_type<tc>, window_params = [{transform_indices = @transform_0, window_bounds = array<i64: 1, 8, 16>}, {transform_indices = @transform_1, window_bounds = array<i64: 1, 8, 16>}, {transform_indices = @transform_2, window_bounds = array<i64: 1, 8, 16>}, {transform_indices = @transform_3, window_bounds = array<i64: 1, 1, 16>}, {transform_indices = @transform_4, window_bounds = array<i64: 1, 1, 16>}, {transform_indices = @transform_5, window_bounds = array<i64: 1, 1, 1>}, {transform_indices = @transform_6, window_bounds = array<i64: 1, 1, 1>}, {transform_indices = @transform_7, window_bounds = array<i64: 1, 1, 1>}]} {
    %c0_i32 = arith.constant 0 : i32
    %0 = arith.cmpi eq, %arg1, %c0_i32 : i32
    %1 = arith.extui %0 : i1 to i32
    %c0_i32_0 = arith.constant 0 : i32
    %2 = arith.cmpi ne, %1, %c0_i32_0 : i32
    scf.if %2 {
      %cst_47 = arith.constant 0.000000e+00 : f32
      %71 = vector.broadcast %cst_47 : f32 to vector<1x1x1xf32>
      %c0_48 = arith.constant 0 : index
      %c0_49 = arith.constant 0 : index
      %c0_50 = arith.constant 0 : index
      %72 = vector.load %arg8[%c0_48, %c0_49, %c0_50] : memref<1x1x1xf32, #tpu.memory_space<vmem>>, vector<1x1x1xf32>
      tpu.vector_store %arg8[%c0_48, %c0_49, %c0_50], %71 {strides = array<i32>} : memref<1x1x1xf32, #tpu.memory_space<vmem>>, vector<1x1x1xf32>,
      %cst_51 = arith.constant 0.000000e+00 : f32
      %73 = vector.broadcast %cst_51 : f32 to vector<1x1x1xf32>
      %c0_52 = arith.constant 0 : index
      %c0_53 = arith.constant 0 : index
      %c0_54 = arith.constant 0 : index
      %74 = vector.load %arg9[%c0_52, %c0_53, %c0_54] : memref<1x1x1xf32, #tpu.memory_space<vmem>>, vector<1x1x1xf32>
      tpu.vector_store %arg9[%c0_52, %c0_53, %c0_54], %73 {strides = array<i32>} : memref<1x1x1xf32, #tpu.memory_space<vmem>>, vector<1x1x1xf32>,
      %cst_55 = arith.constant 0.000000e+00 : f32
      %75 = vector.broadcast %cst_55 : f32 to vector<1x1x1xf32>
      %c0_56 = arith.constant 0 : index
      %c0_57 = arith.constant 0 : index
      %c0_58 = arith.constant 0 : index
      %76 = vector.load %arg10[%c0_56, %c0_57, %c0_58] : memref<1x1x1xf32, #tpu.memory_space<vmem>>, vector<1x1x1xf32>
      tpu.vector_store %arg10[%c0_56, %c0_57, %c0_58], %75 {strides = array<i32>} : memref<1x1x1xf32, #tpu.memory_space<vmem>>, vector<1x1x1xf32>,
    } else {
    }
    %3 = arith.index_cast %arg0 : i32 to index
    %4 = memref.load %arg2[%3] : memref<2xi32, #tpu.memory_space<smem>>
    %5 = tpu.iota {dimensions = array<i32: 2>} : vector<1x1x16xi32>
    %c16_i32 = arith.constant 16 : i32
    %6 = arith.muli %arg1, %c16_i32 : i32
    %7 = vector.broadcast %6 : i32 to vector<1x1x16xi32>
    %8 = arith.addi %5, %7 : vector<1x1x16xi32>
    %9 = vector.broadcast %4 : i32 to vector<1x1x16xi32>
    %10 = arith.cmpi slt, %8, %9 : vector<1x1x16xi32>
    %c0 = arith.constant 0 : index
    %c0_1 = arith.constant 0 : index
    %c0_2 = arith.constant 0 : index
    %11 = vector.load %arg3[%c0, %c0_1, %c0_2] : memref<1x8x16xf32, #tpu.memory_space<vmem>>, vector<1x8x16xf32>
    %c0_3 = arith.constant 0 : index
    %c0_4 = arith.constant 0 : index
    %c0_5 = arith.constant 0 : index
    %12 = vector.load %arg4[%c0_3, %c0_4, %c0_5] : memref<1x8x16xf32, #tpu.memory_space<vmem>>, vector<1x8x16xf32>
    %c0_6 = arith.constant 0 : index
    %c0_7 = arith.constant 0 : index
    %c0_8 = arith.constant 0 : index
    %13 = vector.load %arg5[%c0_6, %c0_7, %c0_8] : memref<1x8x16xf32, #tpu.memory_space<vmem>>, vector<1x8x16xf32>
    %c0_9 = arith.constant 0 : index
    %c0_10 = arith.constant 0 : index
    %c0_11 = arith.constant 0 : index
    %14 = vector.load %arg8[%c0_9, %c0_10, %c0_11] : memref<1x1x1xf32, #tpu.memory_space<vmem>>, vector<1x1x1xf32>
    %15 = arith.subf %11, %13 : vector<1x8x16xf32>
    %16 = math.absf %15 : vector<1x8x16xf32>
    %cst = arith.constant 0.000000e+00 : f32
    %17 = vector.shape_cast %10 : vector<1x1x16xi1> to vector<1x1x16xi1>
    %18 = vector.broadcast %17 : vector<1x1x16xi1> to vector<1x8x16xi1>
    %19 = vector.broadcast %cst : f32 to vector<1x8x16xf32>
    %20 = arith.select %18, %16, %19 : vector<1x8x16xi1>, vector<1x8x16xf32>
    %cst_12 = arith.constant dense<0.000000e+00> : vector<1x16xf32>
    %21 = vector.multi_reduction <add>, %20, %cst_12 [1] : vector<1x8x16xf32> to vector<1x16xf32>
    %22 = vector.shape_cast %21 : vector<1x16xf32> to vector<1x1x16xf32>
    %cst_13 = arith.constant dense<0.000000e+00> : vector<1x1xf32>
    %23 = vector.multi_reduction <add>, %22, %cst_13 [2] : vector<1x1x16xf32> to vector<1x1xf32>
    %24 = vector.shape_cast %23 : vector<1x1xf32> to vector<1x1x1xf32>
    %25 = arith.addf %14, %24 : vector<1x1x1xf32>
    %c0_14 = arith.constant 0 : index
    %c0_15 = arith.constant 0 : index
    %c0_16 = arith.constant 0 : index
    %26 = vector.load %arg8[%c0_14, %c0_15, %c0_16] : memref<1x1x1xf32, #tpu.memory_space<vmem>>, vector<1x1x1xf32>
    tpu.vector_store %arg8[%c0_14, %c0_15, %c0_16], %25 {strides = array<i32>} : memref<1x1x1xf32, #tpu.memory_space<vmem>>, vector<1x1x1xf32>,
    %c0_17 = arith.constant 0 : index
    %c0_18 = arith.constant 0 : index
    %c0_19 = arith.constant 0 : index
    %27 = vector.load %arg9[%c0_17, %c0_18, %c0_19] : memref<1x1x1xf32, #tpu.memory_space<vmem>>, vector<1x1x1xf32>
    %28 = arith.subf %12, %13 : vector<1x8x16xf32>
    %29 = math.absf %28 : vector<1x8x16xf32>
    %cst_20 = arith.constant 0.000000e+00 : f32
    %30 = vector.shape_cast %10 : vector<1x1x16xi1> to vector<1x1x16xi1>
    %31 = vector.broadcast %30 : vector<1x1x16xi1> to vector<1x8x16xi1>
    %32 = vector.broadcast %cst_20 : f32 to vector<1x8x16xf32>
    %33 = arith.select %31, %29, %32 : vector<1x8x16xi1>, vector<1x8x16xf32>
    %cst_21 = arith.constant dense<0.000000e+00> : vector<1x16xf32>
    %34 = vector.multi_reduction <add>, %33, %cst_21 [1] : vector<1x8x16xf32> to vector<1x16xf32>
    %35 = vector.shape_cast %34 : vector<1x16xf32> to vector<1x1x16xf32>
    %cst_22 = arith.constant dense<0.000000e+00> : vector<1x1xf32>
    %36 = vector.multi_reduction <add>, %35, %cst_22 [2] : vector<1x1x16xf32> to vector<1x1xf32>
    %37 = vector.shape_cast %36 : vector<1x1xf32> to vector<1x1x1xf32>
    %38 = arith.addf %27, %37 : vector<1x1x1xf32>
    %c0_23 = arith.constant 0 : index
    %c0_24 = arith.constant 0 : index
    %c0_25 = arith.constant 0 : index
    %39 = vector.load %arg9[%c0_23, %c0_24, %c0_25] : memref<1x1x1xf32, #tpu.memory_space<vmem>>, vector<1x1x1xf32>
    tpu.vector_store %arg9[%c0_23, %c0_24, %c0_25], %38 {strides = array<i32>} : memref<1x1x1xf32, #tpu.memory_space<vmem>>, vector<1x1x1xf32>,
    %c0_26 = arith.constant 0 : index
    %c0_27 = arith.constant 0 : index
    %c0_28 = arith.constant 0 : index
    %40 = vector.load %arg6[%c0_26, %c0_27, %c0_28] : memref<1x1x16xf32, #tpu.memory_space<vmem>>, vector<1x1x16xf32>
    %c0_29 = arith.constant 0 : index
    %c0_30 = arith.constant 0 : index
    %c0_31 = arith.constant 0 : index
    %41 = vector.load %arg7[%c0_29, %c0_30, %c0_31] : memref<1x1x16xf32, #tpu.memory_space<vmem>>, vector<1x1x16xf32>
    %cst_32 = arith.constant 0.000000e+00 : f32
    %42 = vector.broadcast %cst_32 : f32 to vector<1x1x16xf32>
    %43 = arith.subf %42, %40 : vector<1x1x16xf32>
    %cst_33 = arith.constant 0.000000e+00 : f32
    %44 = vector.broadcast %cst_33 : f32 to vector<1x1x16xf32>
    %45 = arith.maximumf %43, %44 : vector<1x1x16xf32>
    %46 = math.absf %40 : vector<1x1x16xf32>
    %cst_34 = arith.constant 0.000000e+00 : f32
    %47 = vector.broadcast %cst_34 : f32 to vector<1x1x16xf32>
    %48 = arith.subf %47, %46 : vector<1x1x16xf32>
    %49 = math.exp %48 : vector<1x1x16xf32>
    %50 = math.log1p %49 : vector<1x1x16xf32>
    %51 = arith.addf %45, %50 : vector<1x1x16xf32>
    %cst_35 = arith.constant 1.000000e+00 : f32
    %52 = vector.broadcast %cst_35 : f32 to vector<1x1x16xf32>
    %53 = arith.subf %52, %41 : vector<1x1x16xf32>
    %54 = arith.mulf %53, %40 : vector<1x1x16xf32>
    %cst_36 = arith.constant 5.000000e+00 : f32
    %55 = vector.broadcast %cst_36 : f32 to vector<1x1x16xf32>
    %56 = arith.mulf %55, %41 : vector<1x1x16xf32>
    %cst_37 = arith.constant 1.000000e+00 : f32
    %57 = vector.broadcast %cst_37 : f32 to vector<1x1x16xf32>
    %58 = arith.subf %57, %41 : vector<1x1x16xf32>
    %59 = arith.addf %56, %58 : vector<1x1x16xf32>
    %60 = arith.mulf %59, %51 : vector<1x1x16xf32>
    %61 = arith.addf %54, %60 : vector<1x1x16xf32>
    %c0_38 = arith.constant 0 : index
    %c0_39 = arith.constant 0 : index
    %c0_40 = arith.constant 0 : index
    %62 = vector.load %arg10[%c0_38, %c0_39, %c0_40] : memref<1x1x1xf32, #tpu.memory_space<vmem>>, vector<1x1x1xf32>
    %cst_41 = arith.constant 0.000000e+00 : f32
    %63 = vector.broadcast %cst_41 : f32 to vector<1x1x16xf32>
    %64 = arith.select %10, %61, %63 : vector<1x1x16xi1>, vector<1x1x16xf32>
    %cst_42 = arith.constant dense<0.000000e+00> : vector<1x16xf32>
    %65 = vector.multi_reduction <add>, %64, %cst_42 [1] : vector<1x1x16xf32> to vector<1x16xf32>
    %66 = vector.shape_cast %65 : vector<1x16xf32> to vector<1x1x16xf32>
    %cst_43 = arith.constant dense<0.000000e+00> : vector<1x1xf32>
    %67 = vector.multi_reduction <add>, %66, %cst_43 [2] : vector<1x1x16xf32> to vector<1x1xf32>
    %68 = vector.shape_cast %67 : vector<1x1xf32> to vector<1x1x1xf32>
    %69 = arith.addf %62, %68 : vector<1x1x1xf32>
    %c0_44 = arith.constant 0 : index
    %c0_45 = arith.constant 0 : index
    %c0_46 = arith.constant 0 : index
    %70 = vector.load %arg10[%c0_44, %c0_45, %c0_46] : memref<1x1x1xf32, #tpu.memory_space<vmem>>, vector<1x1x1xf32>
    tpu.vector_store %arg10[%c0_44, %c0_45, %c0_46], %69 {strides = array<i32>} : memref<1x1x1xf32, #tpu.memory_space<vmem>>, vector<1x1x1xf32>,
    return
  }
  func.func @transform_0(%arg0: i32, %arg1: i32, %arg2: memref<2xi32, #tpu.memory_space<smem>>) -> (i32, i32, i32) {
    %c0_i32 = arith.constant 0 : i32
    %c0_i32_0 = arith.constant 0 : i32
    return %arg0, %c0_i32, %arg1 : i32, i32, i32
  }
  func.func @transform_1(%arg0: i32, %arg1: i32, %arg2: memref<2xi32, #tpu.memory_space<smem>>) -> (i32, i32, i32) {
    %c0_i32 = arith.constant 0 : i32
    %c0_i32_0 = arith.constant 0 : i32
    return %arg0, %c0_i32, %arg1 : i32, i32, i32
  }
  func.func @transform_2(%arg0: i32, %arg1: i32, %arg2: memref<2xi32, #tpu.memory_space<smem>>) -> (i32, i32, i32) {
    %c0_i32 = arith.constant 0 : i32
    %c0_i32_0 = arith.constant 0 : i32
    return %arg0, %c0_i32, %arg1 : i32, i32, i32
  }
  func.func @transform_3(%arg0: i32, %arg1: i32, %arg2: memref<2xi32, #tpu.memory_space<smem>>) -> (i32, i32, i32) {
    %c0_i32 = arith.constant 0 : i32
    %c0_i32_0 = arith.constant 0 : i32
    return %arg0, %c0_i32, %arg1 : i32, i32, i32
  }
  func.func @transform_4(%arg0: i32, %arg1: i32, %arg2: memref<2xi32, #tpu.memory_space<smem>>) -> (i32, i32, i32) {
    %c0_i32 = arith.constant 0 : i32
    %c0_i32_0 = arith.constant 0 : i32
    return %arg0, %c0_i32, %arg1 : i32, i32, i32
  }
  func.func @transform_5(%arg0: i32, %arg1: i32, %arg2: memref<2xi32, #tpu.memory_space<smem>>) -> (i32, i32, i32) {
    %c0_i32 = arith.constant 0 : i32
    %c0_i32_0 = arith.constant 0 : i32
    %c0_i32_1 = arith.constant 0 : i32
    return %arg0, %c0_i32, %c0_i32_0 : i32, i32, i32
  }
  func.func @transform_6(%arg0: i32, %arg1: i32, %arg2: memref<2xi32, #tpu.memory_space<smem>>) -> (i32, i32, i32) {
    %c0_i32 = arith.constant 0 : i32
    %c0_i32_0 = arith.constant 0 : i32
    %c0_i32_1 = arith.constant 0 : i32
    return %arg0, %c0_i32, %c0_i32_0 : i32, i32, i32
  }
  func.func @transform_7(%arg0: i32, %arg1: i32, %arg2: memref<2xi32, #tpu.memory_space<smem>>) -> (i32, i32, i32) {
    %c0_i32 = arith.constant 0 : i32
    %c0_i32_0 = arith.constant 0 : i32
    %c0_i32_1 = arith.constant 0 : i32
    return %arg0, %c0_i32, %c0_i32_0 : i32, i32, i32
  }
}

</mosaic_0001>

<llo_original>
// kernel: tpu_custom_call.1
$region0: #{tpu_custom_call.1}
  #allocation0 [shape = 'u32[]', space=smem, size = 0x4, offset = 0x4, fixed_abs, tag = 'smem constant byte address 0x4 - core index']
  #allocation1 [shape = 'u32[144,128]{1,0:T(1,128)}', space=vmem, size = 0x12000, scoped, tag = 'internal scratch']
  #allocation2 [shape = 's32[1]{0}', space=sflag, size = 0x4, scoped, tag = 'scoped memory for tpu_custom_call.1']
  #allocation3 [shape = 'u8[512]{0}', space=smem, size = 0x200, scoped, tag = 'prefetched SMEM operand 0']
  %s0 = inlined_call_operand.hbm [shape: s32[2], index: 0, kind: input, shape index: {}]
  %s1 = inlined_call_operand.hbm [shape: f32[2,8,16], index: 1, kind: input, shape index: {}]
  %s2 = inlined_call_operand.hbm [shape: f32[2,8,16], index: 2, kind: input, shape index: {}]
  %s3 = inlined_call_operand.hbm [shape: f32[2,8,16], index: 3, kind: input, shape index: {}]
  %s4 = inlined_call_operand.vmem [shape: f32[2,1,16], index: 4, kind: input, shape index: {}]
  %s5 = inlined_call_operand.vmem [shape: f32[2,1,16], index: 5, kind: input, shape index: {}]
  %s6 = inlined_call_operand.vmem [shape: f32[2,1,1], index: 6, kind: output, shape index: {0}]
  %s7 = inlined_call_operand.vmem [shape: f32[2,1,1], index: 7, kind: output, shape index: {1}]
  %s8 = inlined_call_operand.vmem [shape: f32[2,1,1], index: 8, kind: output, shape index: {2}]
  %9 = xla_tuple %s6, %s7, %s8
  %s10 = sld [smem:[#allocation0]]
  $region85: #{tpu_custom_call.1} parent=0
    _
  %s12 = ssub.s32 1, %s10
  %s13 = scalar_select 0, %s12, %s10
  %15 = dma.hbm_to_smem %s0, 16, [#allocation3], [#allocation2]
  %16 = dma.done [#allocation2], 16
  %17 = sfence
  $region1: #{tpu_custom_call.1} parent=0
    #allocation4 [shape = 'u8[8192]{0}', space=vmem, size = 0x2000, scoped, tag = 'input window, operand 1']
    #allocation5 [shape = 's32[2]{0}', space=sflag, size = 0x8, scoped, tag = 'scoped memory for tpu_custom_call.1']
    #allocation6 [shape = 'u8[8192]{0}', space=vmem, size = 0x2000, scoped, tag = 'input window, operand 2']
    #allocation7 [shape = 's32[2]{0}', space=sflag, size = 0x8, scoped, tag = 'scoped memory for tpu_custom_call.1']
    #allocation8 [shape = 'u8[8192]{0}', space=vmem, size = 0x2000, scoped, tag = 'input window, operand 3']
    %18 = vsyncpa [#allocation5], 0
    %s19 = scalar_lea.sflag [#allocation5], 1
    %20 = vsyncpa %s19, 0
    %21 = vsyncpa [#allocation7], 0
    %s22 = scalar_lea.sflag [#allocation7], 1
    %23 = vsyncpa %s22, 0
    loop: start=0, step=1, limit=4
    $region2: #{tpu_custom_call.1} parent=1 // loop_pre_header
      _
    $region3: #{tpu_custom_call.1} parent=1 // loop_header
      %s25 = sphi 0, %s29
      %p26 = scmp.ge.s32.totalorder %s25, 4
      %s32 = sphi 0, %s44
      %s33 = sphi 0, %s40
      %s34 = sphi 0, %s32
      %s35 = sphi 0, %s33
      %s36 = sphi 0, %s34
      %s37 = sphi 0, %s35
      %s49 = sphi 0, %s51
      %s52 = sphi 0, %s49
      %s53 = sphi 0, %s52
      %s69 = sphi 0, %s53
      %s77 = sphi 0, %s79
      %s80 = sphi 0, %s77
      %s81 = sphi 0, %s80
      %s97 = sphi 0, %s81
      %s105 = sphi 0, %s107
      %s108 = sphi 0, %s105
      %s109 = sphi 0, %s108
      %s125 = sphi 0, %s109
      %s133 = sphi 0, %s135
      %s136 = sphi 0, %s133
      %s137 = sphi 0, %s136
      %s153 = sphi 0, %s137
      %s161 = sphi 0, %s163
      %s164 = sphi 0, %s161
      %s165 = sphi 0, %s164
      %s181 = sphi 0, %s165
      %s187 = sphi 0, %s189
      %s190 = sphi 0, %s187
      %s191 = sphi 0, %s190
      %s207 = sphi 0, %s191
      %s213 = sphi 0, %s215
      %s216 = sphi 0, %s213
      %s217 = sphi 0, %s216
      %s233 = sphi 0, %s217
      %s239 = sphi 0, %s241
      %s242 = sphi 0, %s239
      %s243 = sphi 0, %s242
      %s259 = sphi 0, %s243
    $region4: #{tpu_custom_call.1} parent=1 // loop_header_branch
      %28 = sbr.rel (%p26) target = $region8
    $region5: #{tpu_custom_call.1} parent=1 // loop_body
      %s30 = ssub.s32 %s25, 1
      %s31 = ssub.s32 %s25, 2
      %s38 = sadd.s32 1, %s33
      %p39 = scmp.ge.s32.totalorder %s38, 1
      %s40 = scalar_select %p39, 0, %s38
      %s41 = sadd.s32 1, %s32
      %s42 = scalar_select %p39, %s41, %s32
      %p43 = scmp.ge.s32.totalorder %s42, 2
      %s44 = scalar_select %p43, 0, %s42
      %s45 = ssub.s32 %s32, %s44
      %s46 = ssub.s32 %s33, %s40
      %s47 = sor.u32 %s45, %s46
      %p48 = scmp.eq.s32.totalorder %s47, 0
      %s50 = sadd.s32 %s49, 1
      %s51 = scalar_select %p48, %s49, %s50
      %p54 = pneg %p48
      %p55 = scmp.eq.s32.totalorder %s25, 1
      %p56 = por %p54, %p55
      %p57 = scmp.ne.s32.totalorder %s49, %s52
      %p58 = scmp.eq.s32.totalorder %s25, 0
      %p59 = por %p57, %p58
      %p60 = scmp.ne.s32.totalorder %s49, %s52
      %p61 = scmp.eq.s32.totalorder %s30, 1
      %p62 = por %p60, %p61
      %p63 = scmp.ne.s32.totalorder %s52, %s53
      %p64 = scmp.eq.s32.totalorder %s30, 0
      %p65 = por %p63, %p64
      %p66 = scmp.ne.s32.totalorder %s52, %s53
      %p67 = scmp.eq.s32.totalorder %s31, 1
      %p68 = por %p66, %p67
      %p70 = scmp.ne.s32.totalorder %s53, %s69
      %p71 = scmp.eq.s32.totalorder %s31, 0
      %p72 = por %p70, %p71
      %s73 = ssub.s32 %s32, %s44
      %s74 = ssub.s32 %s33, %s40
      %s75 = sor.u32 %s73, %s74
      %p76 = scmp.eq.s32.totalorder %s75, 0
      %s78 = sadd.s32 %s77, 1
      %s79 = scalar_select %p76, %s77, %s78
      %p82 = pneg %p76
      %p83 = scmp.eq.s32.totalorder %s25, 1
      %p84 = por %p82, %p83
      %p85 = scmp.ne.s32.totalorder %s77, %s80
      %p86 = scmp.eq.s32.totalorder %s25, 0
      %p87 = por %p85, %p86
      %p88 = scmp.ne.s32.totalorder %s77, %s80
      %p89 = scmp.eq.s32.totalorder %s30, 1
      %p90 = por %p88, %p89
      %p91 = scmp.ne.s32.totalorder %s80, %s81
      %p92 = scmp.eq.s32.totalorder %s30, 0
      %p93 = por %p91, %p92
      %p94 = scmp.ne.s32.totalorder %s80, %s81
      %p95 = scmp.eq.s32.totalorder %s31, 1
      %p96 = por %p94, %p95
      %p98 = scmp.ne.s32.totalorder %s81, %s97
      %p99 = scmp.eq.s32.totalorder %s31, 0
      %p100 = por %p98, %p99
      %s101 = ssub.s32 %s32, %s44
      %s102 = ssub.s32 %s33, %s40
      %s103 = sor.u32 %s101, %s102
      %p104 = scmp.eq.s32.totalorder %s103, 0
      %s106 = sadd.s32 %s105, 1
      %s107 = scalar_select %p104, %s105, %s106
      %p110 = pneg %p104
      %p111 = scmp.eq.s32.totalorder %s25, 1
      %p112 = por %p110, %p111
      %p113 = scmp.ne.s32.totalorder %s105, %s108
      %p114 = scmp.eq.s32.totalorder %s25, 0
      %p115 = por %p113, %p114
      %p116 = scmp.ne.s32.totalorder %s105, %s108
      %p117 = scmp.eq.s32.totalorder %s30, 1
      %p118 = por %p116, %p117
      %p119 = scmp.ne.s32.totalorder %s108, %s109
      %p120 = scmp.eq.s32.totalorder %s30, 0
      %p121 = por %p119, %p120
      %p122 = scmp.ne.s32.totalorder %s108, %s109
      %p123 = scmp.eq.s32.totalorder %s31, 1
      %p124 = por %p122, %p123
      %p126 = scmp.ne.s32.totalorder %s109, %s125
      %p127 = scmp.eq.s32.totalorder %s31, 0
      %p128 = por %p126, %p127
      %s129 = ssub.s32 %s32, %s44
      %s130 = ssub.s32 %s33, %s40
      %s131 = sor.u32 %s129, %s130
      %p132 = scmp.eq.s32.totalorder %s131, 0
      %s134 = sadd.s32 %s133, 1
      %s135 = scalar_select %p132, %s133, %s134
      %p138 = pneg %p132
      %p139 = scmp.eq.s32.totalorder %s25, 1
      %p140 = por %p138, %p139
      %p141 = scmp.ne.s32.totalorder %s133, %s136
      %p142 = scmp.eq.s32.totalorder %s25, 0
      %p143 = por %p141, %p142
      %p144 = scmp.ne.s32.totalorder %s133, %s136
      %p145 = scmp.eq.s32.totalorder %s30, 1
      %p146 = por %p144, %p145
      %p147 = scmp.ne.s32.totalorder %s136, %s137
      %p148 = scmp.eq.s32.totalorder %s30, 0
      %p149 = por %p147, %p148
      %p150 = scmp.ne.s32.totalorder %s136, %s137
      %p151 = scmp.eq.s32.totalorder %s31, 1
      %p152 = por %p150, %p151
      %p154 = scmp.ne.s32.totalorder %s137, %s153
      %p155 = scmp.eq.s32.totalorder %s31, 0
      %p156 = por %p154, %p155
      %s157 = ssub.s32 %s32, %s44
      %s158 = ssub.s32 %s33, %s40
      %s159 = sor.u32 %s157, %s158
      %p160 = scmp.eq.s32.totalorder %s159, 0
      %s162 = sadd.s32 %s161, 1
      %s163 = scalar_select %p160, %s161, %s162
      %p166 = pneg %p160
      %p167 = scmp.eq.s32.totalorder %s25, 1
      %p168 = por %p166, %p167
      %p169 = scmp.ne.s32.totalorder %s161, %s164
      %p170 = scmp.eq.s32.totalorder %s25, 0
      %p171 = por %p169, %p170
      %p172 = scmp.ne.s32.totalorder %s161, %s164
      %p173 = scmp.eq.s32.totalorder %s30, 1
      %p174 = por %p172, %p173
      %p175 = scmp.ne.s32.totalorder %s164, %s165
      %p176 = scmp.eq.s32.totalorder %s30, 0
      %p177 = por %p175, %p176
      %p178 = scmp.ne.s32.totalorder %s164, %s165
      %p179 = scmp.eq.s32.totalorder %s31, 1
      %p180 = por %p178, %p179
      %p182 = scmp.ne.s32.totalorder %s165, %s181
      %p183 = scmp.eq.s32.totalorder %s31, 0
      %p184 = por %p182, %p183
      %s185 = ssub.s32 %s32, %s44
      %p186 = scmp.eq.s32.totalorder %s185, 0
      %s188 = sadd.s32 %s187, 1
      %s189 = scalar_select %p186, %s187, %s188
      %p192 = pneg %p186
      %p193 = scmp.eq.s32.totalorder %s25, 1
      %p194 = por %p192, %p193
      %p195 = scmp.ne.s32.totalorder %s187, %s190
      %p196 = scmp.eq.s32.totalorder %s25, 0
      %p197 = por %p195, %p196
      %p198 = scmp.ne.s32.totalorder %s187, %s190
      %p199 = scmp.eq.s32.totalorder %s30, 1
      %p200 = por %p198, %p199
      %p201 = scmp.ne.s32.totalorder %s190, %s191
      %p202 = scmp.eq.s32.totalorder %s30, 0
      %p203 = por %p201, %p202
      %p204 = scmp.ne.s32.totalorder %s190, %s191
      %p205 = scmp.eq.s32.totalorder %s31, 1
      %p206 = por %p204, %p205
      %p208 = scmp.ne.s32.totalorder %s191, %s207
      %p209 = scmp.eq.s32.totalorder %s31, 0
      %p210 = por %p208, %p209
      %s211 = ssub.s32 %s32, %s44
      %p212 = scmp.eq.s32.totalorder %s211, 0
      %s214 = sadd.s32 %s213, 1
      %s215 = scalar_select %p212, %s213, %s214
      %p218 = pneg %p212
      %p219 = scmp.eq.s32.totalorder %s25, 1
      %p220 = por %p218, %p219
      %p221 = scmp.ne.s32.totalorder %s213, %s216
      %p222 = scmp.eq.s32.totalorder %s25, 0
      %p223 = por %p221, %p222
      %p224 = scmp.ne.s32.totalorder %s213, %s216
      %p225 = scmp.eq.s32.totalorder %s30, 1
      %p226 = por %p224, %p225
      %p227 = scmp.ne.s32.totalorder %s216, %s217
      %p228 = scmp.eq.s32.totalorder %s30, 0
      %p229 = por %p227, %p228
      %p230 = scmp.ne.s32.totalorder %s216, %s217
      %p231 = scmp.eq.s32.totalorder %s31, 1
      %p232 = por %p230, %p231
      %p234 = scmp.ne.s32.totalorder %s217, %s233
      %p235 = scmp.eq.s32.totalorder %s31, 0
      %p236 = por %p234, %p235
      %s237 = ssub.s32 %s32, %s44
      %p238 = scmp.eq.s32.totalorder %s237, 0
      %s240 = sadd.s32 %s239, 1
      %s241 = scalar_select %p238, %s239, %s240
      %p244 = pneg %p238
      %p245 = scmp.eq.s32.totalorder %s25, 1
      %p246 = por %p244, %p245
      %p247 = scmp.ne.s32.totalorder %s239, %s242
      %p248 = scmp.eq.s32.totalorder %s25, 0
      %p249 = por %p247, %p248
      %p250 = scmp.ne.s32.totalorder %s239, %s242
      %p251 = scmp.eq.s32.totalorder %s30, 1
      %p252 = por %p250, %p251
      %p253 = scmp.ne.s32.totalorder %s242, %s243
      %p254 = scmp.eq.s32.totalorder %s30, 0
      %p255 = por %p253, %p254
      %p256 = scmp.ne.s32.totalorder %s242, %s243
      %p257 = scmp.eq.s32.totalorder %s31, 1
      %p258 = por %p256, %p257
      %p260 = scmp.ne.s32.totalorder %s243, %s259
      %p261 = scmp.eq.s32.totalorder %s31, 0
      %p262 = por %p260, %p261
      %p263 = scmp.le.s32.totalorder 1, %s25
      %p264 = scmp.lt.s32.totalorder %s25, 3
      %p265 = pnand %p263, %p264
      %p266 = pneg %p265
      // Predicated region
      $region9: #{tpu_custom_call.1} parent=5 // pred_check
        _
      $region10: #{tpu_custom_call.1} parent=5 // pred_check_branch
        %268 = sbr.rel (%p265) target = $region12
      $region11: #{tpu_custom_call.1} parent=5 // pred_region
        %s269 = ssub.s32 %s25, 1
      $region12: #{tpu_custom_call.1} parent=5 // pred_fallthru
        _
      %p270 = scmp.lt.s32.totalorder %s25, 2
      // Predicated region
      $region13: #{tpu_custom_call.1} parent=5 // pred_check
        %p271 = pneg %p270
      $region14: #{tpu_custom_call.1} parent=5 // pred_check_branch
        %273 = sbr.rel (%p271) target = $region16
      $region15: #{tpu_custom_call.1} parent=5 // pred_region
        // Predicated region
        $region17: #{tpu_custom_call.1} parent=15 // pred_check
          %p274 = pneg %p59
        $region18: #{tpu_custom_call.1} parent=15 // pred_check_branch
          %276 = sbr.rel (%p274) target = $region20
        $region19: #{tpu_custom_call.1} parent=15 // pred_region
          %s277 = sand.u32 %s49, 1
          %s278 = scalar_lea.sflag [#allocation5], %s277
          %s279 = sand.u32 %s49, 1
          %s280 = smul.addr %s279, 8
          %s281 = scalar_lea.vmem [#allocation4], %s280
          %s283 = ssub.s32 128, 128
          %284 = vsyncadd %s278, %s283
          %s285 = sadd.s32 %s33, %s32
          %s286 = smul.addr %s285, 128
          %s287 = scalar_lea.hbm %s1, %s286
          %s289 = sshll.u32 %s281, 4
          %s290 = int_to_ptr.vmem [resolvable:$true] %s289
          %292 = dma.hbm_to_vmem [thread:$0]  %s287, 128, %s290, %s278
        $region20: #{tpu_custom_call.1} parent=15 // pred_fallthru
          _
        // Predicated region
        $region21: #{tpu_custom_call.1} parent=15 // pred_check
          %p293 = pneg %p87
        $region22: #{tpu_custom_call.1} parent=15 // pred_check_branch
          %295 = sbr.rel (%p293) target = $region24
        $region23: #{tpu_custom_call.1} parent=15 // pred_region
          %s296 = sand.u32 %s25, 1
          %s297 = scalar_lea.sflag [#allocation7], %s296
          %s298 = sand.u32 %s77, 1
          %s299 = smul.addr %s298, 8
          %s300 = scalar_lea.vmem [#allocation6], %s299
          %s302 = ssub.s32 128, 128
          %303 = vsyncadd %s297, %s302
          %s304 = sadd.s32 %s33, %s32
          %s305 = smul.addr %s304, 128
          %s306 = scalar_lea.hbm %s2, %s305
          %s308 = sshll.u32 %s300, 4
          %s309 = int_to_ptr.vmem [resolvable:$true] %s308
          %311 = dma.hbm_to_vmem [thread:$0]  %s306, 128, %s309, %s297
        $region24: #{tpu_custom_call.1} parent=15 // pred_fallthru
          _
        // Predicated region
        $region25: #{tpu_custom_call.1} parent=15 // pred_check
          %p312 = pneg %p115
        $region26: #{tpu_custom_call.1} parent=15 // pred_check_branch
          %314 = sbr.rel (%p312) target = $region28
        $region27: #{tpu_custom_call.1} parent=15 // pred_region
          %s315 = sand.u32 %s25, 1
          %s316 = scalar_lea.sflag [#allocation7], %s315
          %s317 = sand.u32 %s105, 1
          %s318 = smul.addr %s317, 8
          %s319 = scalar_lea.vmem [#allocation8], %s318
          %s321 = ssub.s32 128, 128
          %322 = vsyncadd %s316, %s321
          %s323 = sadd.s32 %s33, %s32
          %s324 = smul.addr %s323, 128
          %s325 = scalar_lea.hbm %s3, %s324
          %s327 = sshll.u32 %s319, 4
          %s328 = int_to_ptr.vmem [resolvable:$true] %s327
          %330 = dma.hbm_to_vmem [thread:$0]  %s325, 128, %s328, %s316
        $region28: #{tpu_custom_call.1} parent=15 // pred_fallthru
          _
        // Predicated region
        $region29: #{tpu_custom_call.1} parent=15 // pred_check
          %p331 = pneg %p143
        $region30: #{tpu_custom_call.1} parent=15 // pred_check_branch
          %333 = sbr.rel (%p331) target = $region32
        $region31: #{tpu_custom_call.1} parent=15 // pred_region
          %p334 = scmp.lt.s32.totalorder %s32, 1
          %s335 = scalar_select %p334, %s32, 1
          %p336 = scmp.lt.s32.totalorder %s33, 0
          %s337 = scalar_select %p336, %s33, 0
          %s338 = sadd.s32 %s337, %s335
          %s339 = scalar_lea.vmem %s4, %s338
        $region32: #{tpu_custom_call.1} parent=15 // pred_fallthru
          _
        // Predicated region
        $region33: #{tpu_custom_call.1} parent=15 // pred_check
          %p340 = pneg %p171
        $region34: #{tpu_custom_call.1} parent=15 // pred_check_branch
          %342 = sbr.rel (%p340) target = $region36
        $region35: #{tpu_custom_call.1} parent=15 // pred_region
          %p343 = scmp.lt.s32.totalorder %s32, 1
          %s344 = scalar_select %p343, %s32, 1
          %p345 = scmp.lt.s32.totalorder %s33, 0
          %s346 = scalar_select %p345, %s33, 0
          %s347 = sadd.s32 %s346, %s344
          %s348 = scalar_lea.vmem %s5, %s347
        $region36: #{tpu_custom_call.1} parent=15 // pred_fallthru
          _
      $region16: #{tpu_custom_call.1} parent=5 // pred_fallthru
        _
      %p349 = scmp.le.s32.totalorder 1, %s25
      %p350 = scmp.lt.s32.totalorder %s25, 3
      %p351 = pnand %p349, %p350
      %p352 = pneg %p351
      // Predicated region
      $region37: #{tpu_custom_call.1} parent=5 // pred_check
        _
      $region38: #{tpu_custom_call.1} parent=5 // pred_check_branch
        %354 = sbr.rel (%p351) target = $region40
      $region39: #{tpu_custom_call.1} parent=5 // pred_region
        %s355 = ssub.s32 %s25, 1
        %s356 = sand.u32 %s52, 1
        %s357 = scalar_lea.sflag [#allocation5], %s356
        %s358 = sand.u32 %s52, 1
        %s359 = smul.addr %s358, 8
        %s360 = scalar_lea.vmem [#allocation4], %s359
        // Predicated region
        $region41: #{tpu_custom_call.1} parent=39 // pred_check
          %p361 = pneg %p65
        $region42: #{tpu_custom_call.1} parent=39 // pred_check_branch
          %363 = sbr.rel (%p361) target = $region44
        $region43: #{tpu_custom_call.1} parent=39 // pred_region
          %364 = dma.done %s357, 128
        $region44: #{tpu_custom_call.1} parent=39 // pred_fallthru
          _
        %s365 = sand.u32 %s30, 1
        %s366 = scalar_lea.sflag [#allocation7], %s365
        %s367 = sand.u32 %s80, 1
        %s368 = smul.addr %s367, 8
        %s369 = scalar_lea.vmem [#allocation6], %s368
        // Predicated region
        $region45: #{tpu_custom_call.1} parent=39 // pred_check
          %p370 = pneg %p93
        $region46: #{tpu_custom_call.1} parent=39 // pred_check_branch
          %372 = sbr.rel (%p370) target = $region48
        $region47: #{tpu_custom_call.1} parent=39 // pred_region
          %373 = dma.done %s366, 128
        $region48: #{tpu_custom_call.1} parent=39 // pred_fallthru
          _
        %s374 = sand.u32 %s30, 1
        %s375 = scalar_lea.sflag [#allocation7], %s374
        %s376 = sand.u32 %s108, 1
        %s377 = smul.addr %s376, 8
        %s378 = scalar_lea.vmem [#allocation8], %s377
        // Predicated region
        $region49: #{tpu_custom_call.1} parent=39 // pred_check
          %p379 = pneg %p121
        $region50: #{tpu_custom_call.1} parent=39 // pred_check_branch
          %381 = sbr.rel (%p379) target = $region52
        $region51: #{tpu_custom_call.1} parent=39 // pred_region
          %382 = dma.done %s375, 128
        $region52: #{tpu_custom_call.1} parent=39 // pred_fallthru
          _
        %s383 = sand.u32 %s52, 1
        %s384 = scalar_lea.sflag [#allocation5], %s383
        %s385 = sand.u32 %s52, 1
        %s386 = smul.addr %s385, 8
        %s387 = scalar_lea.vmem [#allocation4], %s386
        %p388 = pneg %p65
        %p389 = pneg %p62
        %s390 = sand.u32 %s30, 1
        %s391 = scalar_lea.sflag [#allocation7], %s390
        %s392 = sand.u32 %s80, 1
        %s393 = smul.addr %s392, 8
        %s394 = scalar_lea.vmem [#allocation6], %s393
        %p395 = pneg %p93
        %p396 = pneg %p90
        %s397 = sand.u32 %s30, 1
        %s398 = scalar_lea.sflag [#allocation7], %s397
        %s399 = sand.u32 %s108, 1
        %s400 = smul.addr %s399, 8
        %s401 = scalar_lea.vmem [#allocation8], %s400
        %p402 = pneg %p121
        %p403 = pneg %p118
        %p404 = scmp.lt.s32.totalorder %s34, 1
        %s405 = scalar_select %p404, %s34, 1
        %p406 = scmp.lt.s32.totalorder %s35, 0
        %s407 = scalar_select %p406, %s35, 0
        %s408 = sadd.s32 %s407, %s405
        %s409 = scalar_lea.vmem %s4, %s408
        %p410 = pneg %p149
        %p411 = pneg %p146
        %p412 = scmp.lt.s32.totalorder %s34, 1
        %s413 = scalar_select %p412, %s34, 1
        %p414 = scmp.lt.s32.totalorder %s35, 0
        %s415 = scalar_select %p414, %s35, 0
        %s416 = sadd.s32 %s415, %s413
        %s417 = scalar_lea.vmem %s5, %s416
        %p418 = pneg %p177
        %p419 = pneg %p174
        %p420 = pneg %p203
        %p421 = pneg %p200
        %p422 = scmp.lt.s32.totalorder %s34, 1
        %s423 = scalar_select %p422, %s34, 1
        %s424 = scalar_lea.vmem %s6, %s423
        %p425 = pneg %p229
        %p426 = pneg %p226
        %p427 = scmp.lt.s32.totalorder %s34, 1
        %s428 = scalar_select %p427, %s34, 1
        %s429 = scalar_lea.vmem %s7, %s428
        %p430 = pneg %p255
        %p431 = pneg %p252
        %p432 = scmp.lt.s32.totalorder %s34, 1
        %s433 = scalar_select %p432, %s34, 1
        %s434 = scalar_lea.vmem %s8, %s433
        %p435 = scmp.lt.s32.totalorder %s34, 1
        %s436 = scalar_select %p435, %s34, 1
        %p437 = scmp.lt.s32.totalorder %s35, 0
        %s438 = scalar_select %p437, %s35, 0
        %s439 = sadd.s32 %s438, %s436
        %s440 = scalar_lea.vmem %s4, %s439
        %p441 = scmp.lt.s32.totalorder %s34, 1
        %s442 = scalar_select %p441, %s34, 1
        %p443 = scmp.lt.s32.totalorder %s35, 0
        %s444 = scalar_select %p443, %s35, 0
        %s445 = sadd.s32 %s444, %s442
        %s446 = scalar_lea.vmem %s5, %s445
        %p447 = scmp.lt.s32.totalorder %s34, 1
        %s448 = scalar_select %p447, %s34, 1
        %s449 = scalar_lea.vmem %s6, %s448
        %p450 = scmp.lt.s32.totalorder %s34, 1
        %s451 = scalar_select %p450, %s34, 1
        %s452 = scalar_lea.vmem %s7, %s451
        %p453 = scmp.lt.s32.totalorder %s34, 1
        %s454 = scalar_select %p453, %s34, 1
        %s455 = scalar_lea.vmem %s8, %s454
        %p456 = scmp.eq.s32.totalorder %s35, 0
        // Predicated region
        $region53: #{tpu_custom_call.1} parent=39 // pred_check
          %p457 = pneg %p456
        $region54: #{tpu_custom_call.1} parent=39 // pred_check_branch
          %459 = sbr.rel (%p457) target = $region56
        $region55: #{tpu_custom_call.1} parent=39 // pred_region
          %vm460 = vcmask 0
          %461 = vst.msk [vmem:[%s449] sm:$0x1] %vm460, 0.0
          %462 = vst.msk [vmem:[%s452] sm:$0x1] %vm460, 0.0
          %463 = vst.msk [vmem:[%s455] sm:$0x1] %vm460, 0.0
        $region56: #{tpu_custom_call.1} parent=39 // pred_fallthru
          _
        %s464 = sld [smem:[#allocation3 + %s34]]
        %v465 = vlaneseq
        %v466 = vand.u32 %v465, 127
        %s467 = smul.u32 %s35, 16
        %v468 = vstv %s467
        %v469 = vadd.s32 %v466, %v468
        %v470 = vstv %s464
        %vm471 = vcmp.lt.s32.totalorder %v469, %v470
        %v472 = vld [vmem:[%s360] sm:$0xff]
        %v473 = vld [vmem:[%s369] sm:$0xff]
        %v474 = vld [vmem:[%s378] sm:$0xff]
        %v475 = vld [vmem:[%s449] sm:$0x1]
        %v476 = vsub.f32 %v472, %v474
        %v477 = vand.u32 2147483647, %v476
        %v478 = vsel %vm471, 1, 0
        %vm479 = vcmp.eq.s32.totalorder %v478, 1
        %v480 = vsel %vm479, %v477, 0.0
        %vm481 = vcmask 130048
        %v482 = vsel %vm481, %v480, 0.0
        %v483 = vrot.slane %v482, 4
        %v484 = vadd.f32 %v482, %v483
        %v485 = vrot.slane %v484, 2
        %v486 = vadd.f32 %v484, %v485
        %v487 = vrot.slane %v486, 1
        %v488 = vadd.f32 %v486, %v487
        %v489 = vsel %vm481, %v488, 0.0
        %490 = vadd.xlane.f32.xlu0 %v489
        %v491 = vpop.xlane.xlu0 %490
        %v492 = vadd.f32 %v475, %v491
        %vm493 = vcmask 0
        %494 = vst.msk [vmem:[%s449] sm:$0x1] %vm493, %v492
        %v495 = vld [vmem:[%s452] sm:$0x1]
        %v496 = vsub.f32 %v473, %v474
        %v497 = vand.u32 2147483647, %v496
        %v498 = vsel %vm479, %v497, 0.0
        %v499 = vsel %vm481, %v498, 0.0
        %v500 = vrot.slane %v499, 4
        %v501 = vadd.f32 %v499, %v500
        %v502 = vrot.slane %v501, 2
        %v503 = vadd.f32 %v501, %v502
        %v504 = vrot.slane %v503, 1
        %v505 = vadd.f32 %v503, %v504
        %v506 = vsel %vm481, %v505, 0.0
        %507 = vadd.xlane.f32.xlu0 %v506
        %v508 = vpop.xlane.xlu0 %507
        %v509 = vadd.f32 %v495, %v508
        %510 = vst.msk [vmem:[%s452] sm:$0x1] %vm493, %v509
        %v511 = vld [vmem:[%s440] sm:$0x1]
        %v512 = vld [vmem:[%s446] sm:$0x1]
        %v513 = vsub.f32 0.0, %v511
        %v514 = vmax.f32 %v513, 0.0
        %v515 = vand.u32 2147483647, %v511
        %v516 = vsub.f32 0.0, %v515
        %v517 = vmul.f32 %v516, 1.442695
        %v518 = vpow.pop %v517
        %v519 = vadd.f32 %v518, 1.0
        %v520 = vlog2.pop %v519
        %v521 = vmul.f32 %v520, 0.6931472
        %v522 = vmul.f32 -0.5, %v518
        %v523 = vadd.f32 %v522, 1.0
        %v524 = vmul.f32 %v523, %v518
        %v525 = vand.u32 2147483647, %v518
        %vm526 = vcmp.lt.f32.partialorder %v525, 0.0004427343
        %v527 = vsel %vm526, %v524, %v521
        %v528 = vadd.f32 %v514, %v527
        %v529 = vsub.f32 1.0, %v512
        %v530 = vmul.f32 %v529, %v511
        %v531 = vmul.f32 %v512, 5.0
        %v532 = vadd.f32 %v531, %v529
        %v533 = vmul.f32 %v532, %v528
        %v534 = vadd.f32 %v530, %v533
        %v535 = vld [vmem:[%s455] sm:$0x1]
        %v536 = vsel %vm471, %v534, 0.0
        %v537 = vadd.f32 %v536, 0.0
        %vm538 = vcmask 122880
        %v539 = vsel %vm538, %v537, 0.0
        %540 = vadd.xlane.f32.xlu0 %v539
        %v541 = vpop.xlane.xlu0 %540
        %v542 = vadd.f32 %v535, %v541
        %543 = vst.msk [vmem:[%s455] sm:$0x1] %vm493, %v542
        %p544 = scmp.lt.s32.totalorder %s34, 1
        %s545 = scalar_select %p544, %s34, 1
        %s546 = scalar_lea.vmem %s6, %s545
        %p547 = scmp.lt.s32.totalorder %s34, 1
        %s548 = scalar_select %p547, %s34, 1
        %s549 = scalar_lea.vmem %s7, %s548
        %p550 = scmp.lt.s32.totalorder %s34, 1
        %s551 = scalar_select %p550, %s34, 1
        %s552 = scalar_lea.vmem %s8, %s551
        // Predicated region
        $region57: #{tpu_custom_call.1} parent=39 // pred_check
          %p553 = pneg %p200
        $region58: #{tpu_custom_call.1} parent=39 // pred_check_branch
          %555 = sbr.rel (%p553) target = $region60
        $region59: #{tpu_custom_call.1} parent=39 // pred_region
          _
        $region60: #{tpu_custom_call.1} parent=39 // pred_fallthru
          _
        // Predicated region
        $region61: #{tpu_custom_call.1} parent=39 // pred_check
          %p556 = pneg %p226
        $region62: #{tpu_custom_call.1} parent=39 // pred_check_branch
          %558 = sbr.rel (%p556) target = $region64
        $region63: #{tpu_custom_call.1} parent=39 // pred_region
          _
        $region64: #{tpu_custom_call.1} parent=39 // pred_fallthru
          _
        // Predicated region
        $region65: #{tpu_custom_call.1} parent=39 // pred_check
          %p559 = pneg %p252
        $region66: #{tpu_custom_call.1} parent=39 // pred_check_branch
          %561 = sbr.rel (%p559) target = $region68
        $region67: #{tpu_custom_call.1} parent=39 // pred_region
          _
        $region68: #{tpu_custom_call.1} parent=39 // pred_fallthru
          _
      $region40: #{tpu_custom_call.1} parent=5 // pred_fallthru
        _
      %p562 = scmp.le.s32.totalorder 2, %s25
      // Predicated region
      $region69: #{tpu_custom_call.1} parent=5 // pred_check
        %p563 = pneg %p562
      $region70: #{tpu_custom_call.1} parent=5 // pred_check_branch
        %565 = sbr.rel (%p563) target = $region72
      $region71: #{tpu_custom_call.1} parent=5 // pred_region
        %s566 = ssub.s32 %s25, 2
        // Predicated region
        $region73: #{tpu_custom_call.1} parent=71 // pred_check
          %p567 = pneg %p206
        $region74: #{tpu_custom_call.1} parent=71 // pred_check_branch
          %569 = sbr.rel (%p567) target = $region76
        $region75: #{tpu_custom_call.1} parent=71 // pred_region
          %p570 = scmp.lt.s32.totalorder %s36, 1
          %s571 = scalar_select %p570, %s36, 1
          %s572 = scalar_lea.vmem %s6, %s571
        $region76: #{tpu_custom_call.1} parent=71 // pred_fallthru
          _
        // Predicated region
        $region77: #{tpu_custom_call.1} parent=71 // pred_check
          %p573 = pneg %p232
        $region78: #{tpu_custom_call.1} parent=71 // pred_check_branch
          %575 = sbr.rel (%p573) target = $region80
        $region79: #{tpu_custom_call.1} parent=71 // pred_region
          %p576 = scmp.lt.s32.totalorder %s36, 1
          %s577 = scalar_select %p576, %s36, 1
          %s578 = scalar_lea.vmem %s7, %s577
        $region80: #{tpu_custom_call.1} parent=71 // pred_fallthru
          _
        // Predicated region
        $region81: #{tpu_custom_call.1} parent=71 // pred_check
          %p579 = pneg %p258
        $region82: #{tpu_custom_call.1} parent=71 // pred_check_branch
          %581 = sbr.rel (%p579) target = $region84
        $region83: #{tpu_custom_call.1} parent=71 // pred_region
          %p582 = scmp.lt.s32.totalorder %s36, 1
          %s583 = scalar_select %p582, %s36, 1
          %s584 = scalar_lea.vmem %s8, %s583
        $region84: #{tpu_custom_call.1} parent=71 // pred_fallthru
          _
      $region72: #{tpu_custom_call.1} parent=5 // pred_fallthru
        _
    $region6: #{tpu_custom_call.1} parent=1 // loop_footer
      %s29 = sadd.s32 1, %s25
    $region7: #{tpu_custom_call.1} parent=1 // loop_footer_branch
      %24 = sbr.rel target = $region3
    $region8: #{tpu_custom_call.1} parent=1 // loop_exit
      _
    %585 = vsyncpa [#allocation5], 1
    %s586 = scalar_lea.sflag [#allocation5], 1
    %587 = vsyncpa %s586, 1
    %588 = vsyncpa [#allocation7], 1
    %s589 = scalar_lea.sflag [#allocation7], 1
    %590 = vsyncpa %s589, 1

</llo_original>
